<compile_context>
chip_gen: v6e
topology: v6e:2x2x1
jax: 0.10.0
libtpu: 0.0.40
codegen_flags: <defaults>
</compile_context>

<pallas_src>
import functools

import jax
import jax.numpy as jnp
from jax.experimental import pallas as pl
from jax.experimental.pallas import tpu as pltpu

HIDDEN = 128


def _round_up(n, m):
    return ((n + m - 1) // m) * m


def _policy_kernel(xt_ref, w1_ref, b1_ref, w2_ref, b2_ref, w3_ref, b3_ref,
                   mut_ref):
    """Transposed forward: mu^T = W3 @ tanh(W2 @ tanh(W1 @ x^T + b1) + b2) + b3."""
    cdt = w1_ref.dtype  # MXU operand dtype (f32 or bf16); accumulation is f32.

    xt = xt_ref[...]                                            # (d_in_pad, TM) f32

    # fc1 + tanh  (bias add / tanh in f32)
    h1 = jnp.dot(w1_ref[...], xt.astype(cdt),
                 preferred_element_type=jnp.float32)            # (H, TM)
    h1 = jnp.tanh(h1 + b1_ref[...])

    # fc2 + tanh
    h2 = jnp.dot(w2_ref[...], h1.astype(cdt),
                 preferred_element_type=jnp.float32)            # (H, TM)
    h2 = jnp.tanh(h2 + b2_ref[...])

    # fc3 (no activation); sublane-padded, lane-dense output tile
    mu = jnp.dot(w3_ref[...], h2.astype(cdt),
                 preferred_element_type=jnp.float32)            # (out_pad, TM)
    mut_ref[...] = (mu + b3_ref[...]).astype(mut_ref.dtype)


def _resident_spec(block_shape):
    """BlockSpec for VMEM-resident weights/biases (constant index_map).

    Single-buffered (no pointless double-buffer allocation) when the installed
    Pallas exposes pipeline_mode / pl.Buffered; otherwise plain BlockSpec.
    """
    idx = lambda i: (0, 0)
    if hasattr(pl, "Buffered"):
        try:
            return pl.BlockSpec(block_shape, idx, pipeline_mode=pl.Buffered(1))
        except TypeError:  # older jax without the pipeline_mode kwarg
            pass
    return pl.BlockSpec(block_shape, idx)


def gaussian_policy_forward(x, params, *, block_m=2048,
                            weights_dtype=jnp.bfloat16):
    """x: (B, input_dim) float32. params: PyTorch-layout weights/biases.

    params["w*"]: (out_features, in_features), params["b*"]: (out_features, 1).
    Returns (mu, sigma), both (B, output_dim); sigma is ones (computed outside
    the kernel, never written back from it).
    """
    B, d_in = x.shape
    H = params["w1"].shape[0]
    out_dim = params["w3"].shape[0]

    # --- padding / tiling ----------------------------------------------------
    # Output features are sublane-padded (8 rows f32 / 16 rows bf16 weights);
    # the batch sits on the lane axis as a multiple of 128 (unmasked stores).
    sub = 32 // jnp.dtype(weights_dtype).itemsize        # 8 (f32) / 16 (bf16)
    out_pad = _round_up(out_dim, sub)
    d_in_pad = _round_up(d_in, 8)

    b128 = _round_up(max(B, 1), 128)
    tm = min(_round_up(block_m, 128), b128)
    # v7x megacore: keep >= 2 grid tiles when the batch allows it so both
    # TensorCores receive work under dimension_semantics=("parallel",).
    # (No-op on single-TC v5e/v6e.)
    if b128 // tm < 2 and b128 >= 256:
        tm = _round_up(b128 // 2, 128)
    b_pad = _round_up(B, tm)
    grid = (b_pad // tm,)

    # --- operand preparation (all cheap relative to the old 128-lane pad) ----
    xt = jnp.pad(x.T, ((0, d_in_pad - d_in), (0, b_pad - B)))   # (d_in_pad, b_pad)

    w1 = jnp.pad(params["w1"],
                 ((0, 0), (0, d_in_pad - d_in))).astype(weights_dtype)
    w2 = params["w2"].astype(weights_dtype)
    w3 = jnp.pad(params["w3"],
                 ((0, out_pad - out_dim), (0, 0))).astype(weights_dtype)
    b1 = params["b1"]                                            # (H, 1) f32
    b2 = params["b2"]                                            # (H, 1) f32
    b3 = jnp.pad(params["b3"], ((0, out_pad - out_dim), (0, 0)))  # (out_pad, 1)

    mu_t = pl.pallas_call(
        _policy_kernel,
        out_shape=jax.ShapeDtypeStruct((out_pad, b_pad), jnp.float32),
        grid_spec=pltpu.PrefetchScalarGridSpec(
            num_scalar_prefetch=0,
            grid=grid,
            in_specs=[
                # Streamed per batch tile (double-buffered by the pipeline).
                pl.BlockSpec((d_in_pad, tm), lambda i: (0, i)),
                # Weights / biases: VMEM-resident across all grid steps.
                _resident_spec((H, d_in_pad)),
                _resident_spec((H, 1)),
                _resident_spec((H, H)),
                _resident_spec((H, 1)),
                _resident_spec((out_pad, H)),
                _resident_spec((out_pad, 1)),
            ],
            out_specs=pl.BlockSpec((out_pad, tm), lambda i: (0, i)),
        ),
        compiler_params=pltpu.CompilerParams(
            dimension_semantics=("parallel",),
            # Generous for this kernel, and safe on v7x's 64 MiB VMEM.
            vmem_limit_bytes=32 * 1024 * 1024,
        ),
    )(xt, w1, b1, w2, b2, w3, b3)

    # Tiny (out_pad, b_pad) buffer -> final (B, out_dim) view.
    mu = mu_t[:out_dim, :B].T
    sigma = jnp.ones_like(mu)   # constant; never written back from the kernel
    return mu, sigma


def init_params(key, input_dim, output_dim):
    """Deterministic synthetic init (PyTorch-Linear-like uniform bounds).

    Weights are stored in native PyTorch layout (out_features, in_features);
    biases as (out_features, 1) columns (broadcast along the lane/batch axis).
    """
    ks = jax.random.split(key, 6)

    def linear(kw, kb, fan_in, fan_out):
        bound = 1.0 / jnp.sqrt(jnp.float32(fan_in))
        w = jax.random.uniform(kw, (fan_out, fan_in), jnp.float32, -bound, bound)
        b = jax.random.uniform(kb, (fan_out, 1), jnp.float32, -bound, bound)
        return w, b

    w1, b1 = linear(ks[0], ks[1], input_dim, HIDDEN)
    w2, b2 = linear(ks[2], ks[3], HIDDEN, HIDDEN)
    w3, b3 = linear(ks[4], ks[5], HIDDEN, output_dim)
    return {"w1": w1, "b1": b1, "w2": w2, "b2": b2, "w3": w3, "b3": b3}


def reference_forward(x, p):
    h1 = jnp.tanh(x @ p["w1"].T + p["b1"].T)
    h2 = jnp.tanh(h1 @ p["w2"].T + p["b2"].T)
    mu = h2 @ p["w3"].T + p["b3"].T
    return mu, jnp.ones_like(mu)


if __name__ == "__main__":
    key = jax.random.PRNGKey(0)
    k_x, k_p, k_x2 = jax.random.split(key, 3)

    input_dim, output_dim = 4, 3
    params = init_params(k_p, input_dim, output_dim)

    # --- test 1: small batch, f32 weights, tight tolerance -------------------
    batch = 2
    x = jax.random.normal(k_x, (batch, input_dim), jnp.float32)

    fwd_f32 = jax.jit(functools.partial(gaussian_policy_forward,
                                        weights_dtype=jnp.float32))
    mu, sigma = fwd_f32(x, params)
    jax.block_until_ready((mu, sigma))

    mu_ref, sigma_ref = reference_forward(x, params)
    assert mu.shape == (batch, output_dim) and sigma.shape == (batch, output_dim)
    assert jnp.allclose(mu, mu_ref, atol=1e-5, rtol=1e-5)
    assert jnp.allclose(sigma, sigma_ref)

    # --- test 2: larger batch (multi-tile grid), default bf16 weights --------
    batch2 = 1000
    x2 = jax.random.normal(k_x2, (batch2, input_dim), jnp.float32)

    fwd_bf16 = jax.jit(gaussian_policy_forward)   # bf16 MXU operands (default)
    mu2, sigma2 = fwd_bf16(x2, params)
    jax.block_until_ready((mu2, sigma2))

    # Reference uses the same bf16-rounded weights (upcast to f32); the kernel
    # additionally rounds activations to bf16, covered by the tolerance.
    params_bf = {k: (v.astype(jnp.bfloat16).astype(jnp.float32)
                     if k.startswith("w") else v) for k, v in params.items()}
    mu2_ref, sigma2_ref = reference_forward(x2, params_bf)
    assert mu2.shape == (batch2, output_dim)
    assert jnp.allclose(mu2, mu2_ref, atol=3e-2, rtol=3e-2)
    assert jnp.allclose(sigma2, sigma2_ref)

    print("KERNEL_OK")
</pallas_src>

<mosaic_0001>
module attributes {stable_mosaic.version = 11 : i64} {
  func.func @_policy_kernel(%arg0: i32, %arg1: memref<8x128xf32, #tpu.memory_space<vmem>>, %arg2: memref<128x8xf32, #tpu.memory_space<vmem>>, %arg3: memref<128x1xf32, #tpu.memory_space<vmem>>, %arg4: memref<128x128xf32, #tpu.memory_space<vmem>>, %arg5: memref<128x1xf32, #tpu.memory_space<vmem>>, %arg6: memref<8x128xf32, #tpu.memory_space<vmem>>, %arg7: memref<8x1xf32, #tpu.memory_space<vmem>>, %arg8: memref<8x128xf32, #tpu.memory_space<vmem>>) attributes {dimension_semantics = [#tpu.dimension_semantics<parallel>], iteration_bounds = array<i64: 1>, scalar_prefetch = 0 : i64, scratch_operands = 0 : i64, tpu.core_type = #tpu.core_type<tc>, window_params = [{transform_indices = @transform_0, window_bounds = array<i64: 8, 128>}, {pipeline_mode = #tpu.pipeline_mode<synchronous>, transform_indices = @transform_1, window_bounds = array<i64: 128, 8>}, {pipeline_mode = #tpu.pipeline_mode<synchronous>, transform_indices = @transform_2, window_bounds = array<i64: 128, 1>}, {pipeline_mode = #tpu.pipeline_mode<synchronous>, transform_indices = @transform_3, window_bounds = array<i64: 128, 128>}, {pipeline_mode = #tpu.pipeline_mode<synchronous>, transform_indices = @transform_4, window_bounds = array<i64: 128, 1>}, {pipeline_mode = #tpu.pipeline_mode<synchronous>, transform_indices = @transform_5, window_bounds = array<i64: 8, 128>}, {pipeline_mode = #tpu.pipeline_mode<synchronous>, transform_indices = @transform_6, window_bounds = array<i64: 8, 1>}, {transform_indices = @transform_7, window_bounds = array<i64: 8, 128>}]} {
    %c0 = arith.constant 0 : index
    %c0_0 = arith.constant 0 : index
    %0 = vector.load %arg1[%c0, %c0_0] : memref<8x128xf32, #tpu.memory_space<vmem>>, vector<8x128xf32>
    %c0_1 = arith.constant 0 : index
    %c0_2 = arith.constant 0 : index
    %1 = vector.load %arg2[%c0_1, %c0_2] : memref<128x8xf32, #tpu.memory_space<vmem>>, vector<128x8xf32>
    %cst = arith.constant dense<0.000000e+00> : vector<128x128xf32>
    %2 = tpu.matmul %1, %0, %cst {dimension_numbers = #tpu.dot_dimension_numbers<[1], [0], [0], [1], [0, 0, 1, 1], [], []>} : vector<128x8xf32>, vector<8x128xf32>, vector<128x128xf32> -> vector<128x128xf32>
    %c0_3 = arith.constant 0 : index
    %c0_4 = arith.constant 0 : index
    %3 = vector.load %arg3[%c0_3, %c0_4] : memref<128x1xf32, #tpu.memory_space<vmem>>, vector<128x1xf32>
    %4 = vector.broadcast %3 : vector<128x1xf32> to vector<128x128xf32>
    %5 = arith.addf %2, %4 : vector<128x128xf32>
    %6 = math.tanh %5 : vector<128x128xf32>
    %c0_5 = arith.constant 0 : index
    %c0_6 = arith.constant 0 : index
    %7 = vector.load %arg4[%c0_5, %c0_6] : memref<128x128xf32, #tpu.memory_space<vmem>>, vector<128x128xf32>
    %cst_7 = arith.constant dense<0.000000e+00> : vector<128x128xf32>
    %8 = tpu.matmul %7, %6, %cst_7 {dimension_numbers = #tpu.dot_dimension_numbers<[1], [0], [0], [1], [0, 0, 1, 1], [], []>} : vector<128x128xf32>, vector<128x128xf32>, vector<128x128xf32> -> vector<128x128xf32>
    %c0_8 = arith.constant 0 : index
    %c0_9 = arith.constant 0 : index
    %9 = vector.load %arg5[%c0_8, %c0_9] : memref<128x1xf32, #tpu.memory_space<vmem>>, vector<128x1xf32>
    %10 = vector.broadcast %9 : vector<128x1xf32> to vector<128x128xf32>
    %11 = arith.addf %8, %10 : vector<128x128xf32>
    %12 = math.tanh %11 : vector<128x128xf32>
    %c0_10 = arith.constant 0 : index
    %c0_11 = arith.constant 0 : index
    %13 = vector.load %arg6[%c0_10, %c0_11] : memref<8x128xf32, #tpu.memory_space<vmem>>, vector<8x128xf32>
    %cst_12 = arith.constant dense<0.000000e+00> : vector<8x128xf32>
    %14 = tpu.matmul %13, %12, %cst_12 {dimension_numbers = #tpu.dot_dimension_numbers<[1], [0], [0], [1], [0, 0, 1, 1], [], []>} : vector<8x128xf32>, vector<128x128xf32>, vector<8x128xf32> -> vector<8x128xf32>
    %c0_13 = arith.constant 0 : index
    %c0_14 = arith.constant 0 : index
    %15 = vector.load %arg7[%c0_13, %c0_14] : memref<8x1xf32, #tpu.memory_space<vmem>>, vector<8x1xf32>
    %16 = vector.broadcast %15 : vector<8x1xf32> to vector<8x128xf32>
    %17 = arith.addf %14, %16 : vector<8x128xf32>
    %c0_15 = arith.constant 0 : index
    %c0_16 = arith.constant 0 : index
    %18 = vector.load %arg8[%c0_15, %c0_16] : memref<8x128xf32, #tpu.memory_space<vmem>>, vector<8x128xf32>
    tpu.vector_store %arg8[%c0_15, %c0_16], %17 {strides = array<i32>} : memref<8x128xf32, #tpu.memory_space<vmem>>, vector<8x128xf32>,
    return
  }
  func.func @transform_0(%arg0: i32) -> (i32, i32) {
    %c0_i32 = arith.constant 0 : i32
    %c0_i32_0 = arith.constant 0 : i32
    return %c0_i32, %arg0 : i32, i32
  }
  func.func @transform_1(%arg0: i32) -> (i32, i32) {
    %c0_i32 = arith.constant 0 : i32
    %c0_i32_0 = arith.constant 0 : i32
    %c0_i32_1 = arith.constant 0 : i32
    return %c0_i32, %c0_i32_0 : i32, i32
  }
  func.func @transform_2(%arg0: i32) -> (i32, i32) {
    %c0_i32 = arith.constant 0 : i32
    %c0_i32_0 = arith.constant 0 : i32
    %c0_i32_1 = arith.constant 0 : i32
    return %c0_i32, %c0_i32_0 : i32, i32
  }
  func.func @transform_3(%arg0: i32) -> (i32, i32) {
    %c0_i32 = arith.constant 0 : i32
    %c0_i32_0 = arith.constant 0 : i32
    %c0_i32_1 = arith.constant 0 : i32
    return %c0_i32, %c0_i32_0 : i32, i32
  }
  func.func @transform_4(%arg0: i32) -> (i32, i32) {
    %c0_i32 = arith.constant 0 : i32
    %c0_i32_0 = arith.constant 0 : i32
    %c0_i32_1 = arith.constant 0 : i32
    return %c0_i32, %c0_i32_0 : i32, i32
  }
  func.func @transform_5(%arg0: i32) -> (i32, i32) {
    %c0_i32 = arith.constant 0 : i32
    %c0_i32_0 = arith.constant 0 : i32
    %c0_i32_1 = arith.constant 0 : i32
    return %c0_i32, %c0_i32_0 : i32, i32
  }
  func.func @transform_6(%arg0: i32) -> (i32, i32) {
    %c0_i32 = arith.constant 0 : i32
    %c0_i32_0 = arith.constant 0 : i32
    %c0_i32_1 = arith.constant 0 : i32
    return %c0_i32, %c0_i32_0 : i32, i32
  }
  func.func @transform_7(%arg0: i32) -> (i32, i32) {
    %c0_i32 = arith.constant 0 : i32
    %c0_i32_0 = arith.constant 0 : i32
    return %c0_i32, %arg0 : i32, i32
  }
}

</mosaic_0001>

<llo_original>
// kernel: gaussian_policy_forward.1
$region0: #{gaussian_policy_forward.1}
  #allocation0 [shape = 'u32[]', space=smem, size = 0x4, offset = 0x4, fixed_abs, tag = 'smem constant byte address 0x4 - core index']
  #allocation1 [shape = 'u32[144,128]{1,0:T(1,128)}', space=vmem, size = 0x12000, scoped, tag = 'internal scratch']
  %s0 = inlined_call_operand.vmem [shape: f32[8,128], index: 0, kind: input, shape index: {}]
  %s1 = inlined_call_operand.vmem [shape: f32[128,8], index: 1, kind: input, shape index: {}]
  %s2 = inlined_call_operand.vmem [shape: f32[128,1], index: 2, kind: input, shape index: {}]
  %s3 = inlined_call_operand.vmem [shape: f32[128,128], index: 3, kind: input, shape index: {}]
  %s4 = inlined_call_operand.vmem [shape: f32[128,1], index: 4, kind: input, shape index: {}]
  %s5 = inlined_call_operand.vmem [shape: f32[8,128], index: 5, kind: input, shape index: {}]
  %s6 = inlined_call_operand.vmem [shape: f32[8,1], index: 6, kind: input, shape index: {}]
  %s7 = inlined_call_operand.vmem [shape: f32[8,128], index: 7, kind: output, shape index: {}]
  %s8 = sld [smem:[#allocation0]]
  $region38: #{gaussian_policy_forward.1} parent=0
    _
  %s10 = ssub.s32 1, %s8
  %s11 = scalar_select 0, %s10, %s8
  // Predicated region
  $region2: #{gaussian_policy_forward.1} parent=0 // pred_check
    _
  $region3: #{gaussian_policy_forward.1} parent=0 // pred_check_branch
    %13 = sbr.rel (0) target = $region5
  $region4: #{gaussian_policy_forward.1} parent=0 // pred_region
    _
  $region5: #{gaussian_policy_forward.1} parent=0 // pred_fallthru
    _
  // Predicated region
  $region6: #{gaussian_policy_forward.1} parent=0 // pred_check
    _
  $region7: #{gaussian_policy_forward.1} parent=0 // pred_check_branch
    %15 = sbr.rel (0) target = $region9
  $region8: #{gaussian_policy_forward.1} parent=0 // pred_region
    _
  $region9: #{gaussian_policy_forward.1} parent=0 // pred_fallthru
    _
  // Predicated region
  $region10: #{gaussian_policy_forward.1} parent=0 // pred_check
    _
  $region11: #{gaussian_policy_forward.1} parent=0 // pred_check_branch
    %17 = sbr.rel (0) target = $region13
  $region12: #{gaussian_policy_forward.1} parent=0 // pred_region
    _
  $region13: #{gaussian_policy_forward.1} parent=0 // pred_fallthru
    _
  // Predicated region
  $region14: #{gaussian_policy_forward.1} parent=0 // pred_check
    _
  $region15: #{gaussian_policy_forward.1} parent=0 // pred_check_branch
    %19 = sbr.rel (0) target = $region17
  $region16: #{gaussian_policy_forward.1} parent=0 // pred_region
    _
  $region17: #{gaussian_policy_forward.1} parent=0 // pred_fallthru
    _
  // Predicated region
  $region18: #{gaussian_policy_forward.1} parent=0 // pred_check
    _
  $region19: #{gaussian_policy_forward.1} parent=0 // pred_check_branch
    %21 = sbr.rel (0) target = $region21
  $region20: #{gaussian_policy_forward.1} parent=0 // pred_region
    _
  $region21: #{gaussian_policy_forward.1} parent=0 // pred_fallthru
    _
  // Predicated region
  $region22: #{gaussian_policy_forward.1} parent=0 // pred_check
    _
  $region23: #{gaussian_policy_forward.1} parent=0 // pred_check_branch
    %23 = sbr.rel (0) target = $region25
  $region24: #{gaussian_policy_forward.1} parent=0 // pred_region
    _
  $region25: #{gaussian_policy_forward.1} parent=0 // pred_fallthru
    _
  // Predicated region
  $region26: #{gaussian_policy_forward.1} parent=0 // pred_check
    _
  $region27: #{gaussian_policy_forward.1} parent=0 // pred_check_branch
    %25 = sbr.rel (0) target = $region29
  $region28: #{gaussian_policy_forward.1} parent=0 // pred_region
    _
  $region29: #{gaussian_policy_forward.1} parent=0 // pred_fallthru
    _
  %v26 = vld [vmem:[%s0] sm:$0xff]
  %v27 = vld [vmem:[%s1] sm:$0xff]
  %v28 = vld [vmem:[%s1 + $0x8] sm:$0xff]
  %v29 = vld [vmem:[%s1 + $0x10] sm:$0xff]
  %v30 = vld [vmem:[%s1 + $0x18] sm:$0xff]
  %v31 = vld [vmem:[%s1 + $0x20] sm:$0xff]
  %v32 = vld [vmem:[%s1 + $0x28] sm:$0xff]
  %v33 = vld [vmem:[%s1 + $0x30] sm:$0xff]
  %v34 = vld [vmem:[%s1 + $0x38] sm:$0xff]
  %v35 = vld [vmem:[%s1 + $0x40] sm:$0xff]
  %v36 = vld [vmem:[%s1 + $0x48] sm:$0xff]
  %v37 = vld [vmem:[%s1 + $0x50] sm:$0xff]
  %v38 = vld [vmem:[%s1 + $0x58] sm:$0xff]
  %v39 = vld [vmem:[%s1 + $0x60] sm:$0xff]
  %v40 = vld [vmem:[%s1 + $0x68] sm:$0xff]
  %v41 = vld [vmem:[%s1 + $0x70] sm:$0xff]
  %v42 = vld [vmem:[%s1 + $0x78] sm:$0xff]
  %v43 = vld [vmem:[%s2] sm:$0xff]
  %v44 = vld [vmem:[%s2 + $0x8] sm:$0xff]
  %v45 = vld [vmem:[%s2 + $0x10] sm:$0xff]
  %v46 = vld [vmem:[%s2 + $0x18] sm:$0xff]
  %v47 = vld [vmem:[%s2 + $0x20] sm:$0xff]
  %v48 = vld [vmem:[%s2 + $0x28] sm:$0xff]
  %v49 = vld [vmem:[%s2 + $0x30] sm:$0xff]
  %v50 = vld [vmem:[%s2 + $0x38] sm:$0xff]
  %v51 = vld [vmem:[%s2 + $0x40] sm:$0xff]
  %v52 = vld [vmem:[%s2 + $0x48] sm:$0xff]
  %v53 = vld [vmem:[%s2 + $0x50] sm:$0xff]
  %v54 = vld [vmem:[%s2 + $0x58] sm:$0xff]
  %v55 = vld [vmem:[%s2 + $0x60] sm:$0xff]
  %v56 = vld [vmem:[%s2 + $0x68] sm:$0xff]
  %v57 = vld [vmem:[%s2 + $0x70] sm:$0xff]
  %v58 = vld [vmem:[%s2 + $0x78] sm:$0xff]
  %60 = vset.pattern.permute.xlu0 0
  %61 = vperm.xlu0 %60, %v43
  %v62 = vpop.permute.xlu0 %61
  %65 = vset.pattern.permute.xlu0 0
  %66 = vperm.xlu0 %65, %v44
  %v67 = vpop.permute.xlu0 %66
  %70 = vset.pattern.permute.xlu0 0
  %71 = vperm.xlu0 %70, %v45
  %v72 = vpop.permute.xlu0 %71
  %75 = vset.pattern.permute.xlu0 0
  %76 = vperm.xlu0 %75, %v46
  %v77 = vpop.permute.xlu0 %76
  %80 = vset.pattern.permute.xlu0 0
  %81 = vperm.xlu0 %80, %v47
  %v82 = vpop.permute.xlu0 %81
  %85 = vset.pattern.permute.xlu0 0
  %86 = vperm.xlu0 %85, %v48
  %v87 = vpop.permute.xlu0 %86
  %90 = vset.pattern.permute.xlu0 0
  %91 = vperm.xlu0 %90, %v49
  %v92 = vpop.permute.xlu0 %91
  %95 = vset.pattern.permute.xlu0 0
  %96 = vperm.xlu0 %95, %v50
  %v97 = vpop.permute.xlu0 %96
  %100 = vset.pattern.permute.xlu0 0
  %101 = vperm.xlu0 %100, %v51
  %v102 = vpop.permute.xlu0 %101
  %105 = vset.pattern.permute.xlu0 0
  %106 = vperm.xlu0 %105, %v52
  %v107 = vpop.permute.xlu0 %106
  %110 = vset.pattern.permute.xlu0 0
  %111 = vperm.xlu0 %110, %v53
  %v112 = vpop.permute.xlu0 %111
  %115 = vset.pattern.permute.xlu0 0
  %116 = vperm.xlu0 %115, %v54
  %v117 = vpop.permute.xlu0 %116
  %120 = vset.pattern.permute.xlu0 0
  %121 = vperm.xlu0 %120, %v55
  %v122 = vpop.permute.xlu0 %121
  %125 = vset.pattern.permute.xlu0 0
  %126 = vperm.xlu0 %125, %v56
  %v127 = vpop.permute.xlu0 %126
  %130 = vset.pattern.permute.xlu0 0
  %131 = vperm.xlu0 %130, %v57
  %v132 = vpop.permute.xlu0 %131
  %135 = vset.pattern.permute.xlu0 0
  %136 = vperm.xlu0 %135, %v58
  %v137 = vpop.permute.xlu0 %136
  %vm139 = vcmask 64512
  %v141 = vsel %vm139, %v27, 0
  %v144 = vsel %vm139, %v28, 0
  %v147 = vsel %vm139, %v29, 0
  %v150 = vsel %vm139, %v30, 0
  %v153 = vsel %vm139, %v31, 0
  %v156 = vsel %vm139, %v32, 0
  %v159 = vsel %vm139, %v33, 0
  %v162 = vsel %vm139, %v34, 0
  %v165 = vsel %vm139, %v35, 0
  %v168 = vsel %vm139, %v36, 0
  %v171 = vsel %vm139, %v37, 0
  %v174 = vsel %vm139, %v38, 0
  %v177 = vsel %vm139, %v39, 0
  %v180 = vsel %vm139, %v40, 0
  %v183 = vsel %vm139, %v41, 0
  %v186 = vsel %vm139, %v42, 0
  %188 = vmatprep.subr.mxu0 0.0
  %189 = vmatpush1.msra.mxu0 0.0
  %190 = vmatprep.subr.mxu0 0.0
  %191 = vmatpush1.msra.mxu0 0.0
  %192 = vmatprep.subr.mxu0 0.0
  %193 = vmatpush1.msra.mxu0 0.0
  %194 = vmatprep.subr.mxu0 0.0
  %195 = vmatpush1.msra.mxu0 0.0
  %196 = vmatprep.subr.mxu0 0.0
  %197 = vmatpush1.msra.mxu0 0.0
  %198 = vmatprep.subr.mxu0 0.0
  %199 = vmatpush1.msra.mxu0 0.0
  %200 = vmatprep.subr.mxu0 0.0
  %201 = vmatpush1.msra.mxu0 0.0
  %202 = vmatprep.subr.mxu0 0.0
  %203 = vmatpush1.msra.mxu0 0.0
  %204 = vmatprep.subr.mxu0 0.0
  %205 = vmatpush1.msra.mxu0 0.0
  %206 = vmatprep.subr.mxu0 0.0
  %207 = vmatpush1.msra.mxu0 0.0
  %208 = vmatprep.subr.mxu0 0.0
  %209 = vmatpush1.msra.mxu0 0.0
  %210 = vmatprep.subr.mxu0 0.0
  %211 = vmatpush1.msra.mxu0 0.0
  %212 = vmatprep.subr.mxu0 0.0
  %213 = vmatpush1.msra.mxu0 0.0
  %214 = vmatprep.subr.mxu0 0.0
  %215 = vmatpush1.msra.mxu0 0.0
  %216 = vmatprep.subr.mxu0 0.0
  %217 = vmatpush1.msra.mxu0 0.0
  %218 = vmatprep.subr.mxu0 0.0
  %219 = vmatpush1.msra.mxu0 %v26
  %220 = vmatprep.subr.mxu0 0.0
  %221 = vmatpush2.msra.mxu0 0.0
  %222 = vmatprep.subr.mxu0 0.0
  %223 = vmatpush2.msra.mxu0 0.0
  %224 = vmatprep.subr.mxu0 0.0
  %225 = vmatpush2.msra.mxu0 0.0
  %226 = vmatprep.subr.mxu0 0.0
  %227 = vmatpush2.msra.mxu0 0.0
  %228 = vmatprep.subr.mxu0 0.0
  %229 = vmatpush2.msra.mxu0 0.0
  %230 = vmatprep.subr.mxu0 0.0
  %231 = vmatpush2.msra.mxu0 0.0
  %232 = vmatprep.subr.mxu0 0.0
  %233 = vmatpush2.msra.mxu0 0.0
  %234 = vmatprep.subr.mxu0 0.0
  %235 = vmatpush2.msra.mxu0 0.0
  %236 = vmatprep.subr.mxu0 0.0
  %237 = vmatpush2.msra.mxu0 0.0
  %238 = vmatprep.subr.mxu0 0.0
  %239 = vmatpush2.msra.mxu0 0.0
  %240 = vmatprep.subr.mxu0 0.0
  %241 = vmatpush2.msra.mxu0 0.0
  %242 = vmatprep.subr.mxu0 0.0
  %243 = vmatpush2.msra.mxu0 0.0
  %244 = vmatprep.subr.mxu0 0.0
  %245 = vmatpush2.msra.mxu0 0.0
  %246 = vmatprep.subr.mxu0 0.0
  %247 = vmatpush2.msra.mxu0 0.0
  %248 = vmatprep.subr.mxu0 0.0
  %249 = vmatpush2.msra.mxu0 0.0
  %250 = vmatprep.subr.mxu0 0.0
  %251 = vmatpush2.msra.mxu0 0.0
  %252 = vmatprep.mubr.f32.mxu0 0.0
  %253 = vmatmul.mubr.f32.gmra.mxu0 %v141
  %v254 = vpop.f32.mrf.mxu0
  %v255 = vadd.f32 %v62, %v254
  %v256 = vpop.f32.mrf.mxu0
  %257 = vmatprep.mubr.f32.mxu0 0.0
  %258 = vmatmul.mubr.f32.gmra.mxu0 %v144
  %v259 = vpop.f32.mrf.mxu0
  %v260 = vadd.f32 %v67, %v259
  %v261 = vpop.f32.mrf.mxu0
  %262 = vmatprep.mubr.f32.mxu0 0.0
  %263 = vmatmul.mubr.f32.gmra.mxu0 %v147
  %v264 = vpop.f32.mrf.mxu0
  %v265 = vadd.f32 %v72, %v264
  %v266 = vpop.f32.mrf.mxu0
  %267 = vmatprep.mubr.f32.mxu0 0.0
  %268 = vmatmul.mubr.f32.gmra.mxu0 %v150
  %v269 = vpop.f32.mrf.mxu0
  %v270 = vadd.f32 %v77, %v269
  %v271 = vpop.f32.mrf.mxu0
  %272 = vmatprep.mubr.f32.mxu0 0.0
  %273 = vmatmul.mubr.f32.gmra.mxu0 %v153
  %v274 = vpop.f32.mrf.mxu0
  %v275 = vadd.f32 %v82, %v274
  %v276 = vpop.f32.mrf.mxu0
  %277 = vmatprep.mubr.f32.mxu0 0.0
  %278 = vmatmul.mubr.f32.gmra.mxu0 %v156
  %v279 = vpop.f32.mrf.mxu0
  %v280 = vadd.f32 %v87, %v279
  %v281 = vpop.f32.mrf.mxu0
  %282 = vmatprep.mubr.f32.mxu0 0.0
  %283 = vmatmul.mubr.f32.gmra.mxu0 %v159
  %v284 = vpop.f32.mrf.mxu0
  %v285 = vadd.f32 %v92, %v284
  %v286 = vpop.f32.mrf.mxu0
  %287 = vmatprep.mubr.f32.mxu0 0.0
  %288 = vmatmul.mubr.f32.gmra.mxu0 %v162
  %v289 = vpop.f32.mrf.mxu0
  %v290 = vadd.f32 %v97, %v289
  %v291 = vpop.f32.mrf.mxu0
  %292 = vmatprep.mubr.f32.mxu0 0.0
  %293 = vmatmul.mubr.f32.gmra.mxu0 %v165
  %v294 = vpop.f32.mrf.mxu0
  %v295 = vadd.f32 %v102, %v294
  %v296 = vpop.f32.mrf.mxu0
  %297 = vmatprep.mubr.f32.mxu0 0.0
  %298 = vmatmul.mubr.f32.gmra.mxu0 %v168
  %v299 = vpop.f32.mrf.mxu0
  %v300 = vadd.f32 %v107, %v299
  %v301 = vpop.f32.mrf.mxu0
  %302 = vmatprep.mubr.f32.mxu0 0.0
  %303 = vmatmul.mubr.f32.gmra.mxu0 %v171
  %v304 = vpop.f32.mrf.mxu0
  %v305 = vadd.f32 %v112, %v304
  %v306 = vpop.f32.mrf.mxu0
  %307 = vmatprep.mubr.f32.mxu0 0.0
  %308 = vmatmul.mubr.f32.gmra.mxu0 %v174
  %v309 = vpop.f32.mrf.mxu0
  %v310 = vadd.f32 %v117, %v309
  %v311 = vpop.f32.mrf.mxu0
  %312 = vmatprep.mubr.f32.mxu0 0.0
  %313 = vmatmul.mubr.f32.gmra.mxu0 %v177
  %v314 = vpop.f32.mrf.mxu0
  %v315 = vadd.f32 %v122, %v314
  %v316 = vpop.f32.mrf.mxu0
  %317 = vmatprep.mubr.f32.mxu0 0.0
  %318 = vmatmul.mubr.f32.gmra.mxu0 %v180
  %v319 = vpop.f32.mrf.mxu0
  %v320 = vadd.f32 %v127, %v319
  %v321 = vpop.f32.mrf.mxu0
  %322 = vmatprep.mubr.f32.mxu0 0.0
  %323 = vmatmul.mubr.f32.gmra.mxu0 %v183
  %v324 = vpop.f32.mrf.mxu0
  %v325 = vadd.f32 %v132, %v324
  %v326 = vpop.f32.mrf.mxu0
  %327 = vmatprep.mubr.f32.mxu0 0.0
  %328 = vmatmul.mubr.f32.gmra.mxu0 %v186
  %v329 = vpop.f32.mrf.mxu0
  %v330 = vadd.f32 %v137, %v329
  %v331 = vpop.f32.mrf.mxu0
  %332 = vdwg.mxu0
  %v333 = vtanh.pop %v255
  %v334 = vtanh.pop %v260
  %v335 = vtanh.pop %v265
  %v336 = vtanh.pop %v270
  %v337 = vtanh.pop %v275
  %v338 = vtanh.pop %v280
  %v339 = vtanh.pop %v285
  %v340 = vtanh.pop %v290
  %v341 = vtanh.pop %v295
  %v342 = vtanh.pop %v300
  %v343 = vtanh.pop %v305
  %v344 = vtanh.pop %v310
  %v345 = vtanh.pop %v315
  %v346 = vtanh.pop %v320
  %v347 = vtanh.pop %v325
  %v348 = vtanh.pop %v330
  %v349 = vld [vmem:[%s3] sm:$0xff]
  %v350 = vld [vmem:[%s3 + $0x8] sm:$0xff]
  %v351 = vld [vmem:[%s3 + $0x10] sm:$0xff]
  %v352 = vld [vmem:[%s3 + $0x18] sm:$0xff]
  %v353 = vld [vmem:[%s3 + $0x20] sm:$0xff]
  %v354 = vld [vmem:[%s3 + $0x28] sm:$0xff]
  %v355 = vld [vmem:[%s3 + $0x30] sm:$0xff]
  %v356 = vld [vmem:[%s3 + $0x38] sm:$0xff]
  %v357 = vld [vmem:[%s3 + $0x40] sm:$0xff]
  %v358 = vld [vmem:[%s3 + $0x48] sm:$0xff]
  %v359 = vld [vmem:[%s3 + $0x50] sm:$0xff]
  %v360 = vld [vmem:[%s3 + $0x58] sm:$0xff]
  %v361 = vld [vmem:[%s3 + $0x60] sm:$0xff]
  %v362 = vld [vmem:[%s3 + $0x68] sm:$0xff]
  %v363 = vld [vmem:[%s3 + $0x70] sm:$0xff]
  %v364 = vld [vmem:[%s3 + $0x78] sm:$0xff]
  %v365 = vld [vmem:[%s4] sm:$0xff]
  %v366 = vld [vmem:[%s4 + $0x8] sm:$0xff]
  %v367 = vld [vmem:[%s4 + $0x10] sm:$0xff]
  %v368 = vld [vmem:[%s4 + $0x18] sm:$0xff]
  %v369 = vld [vmem:[%s4 + $0x20] sm:$0xff]
  %v370 = vld [vmem:[%s4 + $0x28] sm:$0xff]
  %v371 = vld [vmem:[%s4 + $0x30] sm:$0xff]
  %v372 = vld [vmem:[%s4 + $0x38] sm:$0xff]
  %v373 = vld [vmem:[%s4 + $0x40] sm:$0xff]
  %v374 = vld [vmem:[%s4 + $0x48] sm:$0xff]
  %v375 = vld [vmem:[%s4 + $0x50] sm:$0xff]
  %v376 = vld [vmem:[%s4 + $0x58] sm:$0xff]
  %v377 = vld [vmem:[%s4 + $0x60] sm:$0xff]
  %v378 = vld [vmem:[%s4 + $0x68] sm:$0xff]
  %v379 = vld [vmem:[%s4 + $0x70] sm:$0xff]
  %v380 = vld [vmem:[%s4 + $0x78] sm:$0xff]
  %382 = vset.pattern.permute.xlu0 0
  %383 = vperm.xlu0 %382, %v365
  %v384 = vpop.permute.xlu0 %383
  %387 = vset.pattern.permute.xlu0 0
  %388 = vperm.xlu0 %387, %v366
  %v389 = vpop.permute.xlu0 %388
  %392 = vset.pattern.permute.xlu0 0
  %393 = vperm.xlu0 %392, %v367
  %v394 = vpop.permute.xlu0 %393
  %397 = vset.pattern.permute.xlu0 0
  %398 = vperm.xlu0 %397, %v368
  %v399 = vpop.permute.xlu0 %398
  %402 = vset.pattern.permute.xlu0 0
  %403 = vperm.xlu0 %402, %v369
  %v404 = vpop.permute.xlu0 %403
  %407 = vset.pattern.permute.xlu0 0
  %408 = vperm.xlu0 %407, %v370
  %v409 = vpop.permute.xlu0 %408
  %412 = vset.pattern.permute.xlu0 0
  %413 = vperm.xlu0 %412, %v371
  %v414 = vpop.permute.xlu0 %413
  %417 = vset.pattern.permute.xlu0 0
  %418 = vperm.xlu0 %417, %v372
  %v419 = vpop.permute.xlu0 %418
  %422 = vset.pattern.permute.xlu0 0
  %423 = vperm.xlu0 %422, %v373
  %v424 = vpop.permute.xlu0 %423
  %427 = vset.pattern.permute.xlu0 0
  %428 = vperm.xlu0 %427, %v374
  %v429 = vpop.permute.xlu0 %428
  %432 = vset.pattern.permute.xlu0 0
  %433 = vperm.xlu0 %432, %v375
  %v434 = vpop.permute.xlu0 %433
  %437 = vset.pattern.permute.xlu0 0
  %438 = vperm.xlu0 %437, %v376
  %v439 = vpop.permute.xlu0 %438
  %442 = vset.pattern.permute.xlu0 0
  %443 = vperm.xlu0 %442, %v377
  %v444 = vpop.permute.xlu0 %443
  %447 = vset.pattern.permute.xlu0 0
  %448 = vperm.xlu0 %447, %v378
  %v449 = vpop.permute.xlu0 %448
  %452 = vset.pattern.permute.xlu0 0
  %453 = vperm.xlu0 %452, %v379
  %v454 = vpop.permute.xlu0 %453
  %457 = vset.pattern.permute.xlu0 0
  %458 = vperm.xlu0 %457, %v380
  %v459 = vpop.permute.xlu0 %458
  %461 = vmatprep.subr.mxu0 0.0
  %462 = vmatpush1.msra.mxu0 %v348
  %463 = vmatprep.subr.mxu0 0.0
  %464 = vmatpush1.msra.mxu0 %v347
  %465 = vmatprep.subr.mxu0 0.0
  %466 = vmatpush1.msra.mxu0 %v346
  %467 = vmatprep.subr.mxu0 0.0
  %468 = vmatpush1.msra.mxu0 %v345
  %469 = vmatprep.subr.mxu0 0.0
  %470 = vmatpush1.msra.mxu0 %v344
  %471 = vmatprep.subr.mxu0 0.0
  %472 = vmatpush1.msra.mxu0 %v343
  %473 = vmatprep.subr.mxu0 0.0
  %474 = vmatpush1.msra.mxu0 %v342
  %475 = vmatprep.subr.mxu0 0.0
  %476 = vmatpush1.msra.mxu0 %v341
  %477 = vmatprep.subr.mxu0 0.0
  %478 = vmatpush1.msra.mxu0 %v340
  %479 = vmatprep.subr.mxu0 0.0
  %480 = vmatpush1.msra.mxu0 %v339
  %481 = vmatprep.subr.mxu0 0.0
  %482 = vmatpush1.msra.mxu0 %v338
  %483 = vmatprep.subr.mxu0 0.0
  %484 = vmatpush1.msra.mxu0 %v337
  %485 = vmatprep.subr.mxu0 0.0
  %486 = vmatpush1.msra.mxu0 %v336
  %487 = vmatprep.subr.mxu0 0.0
  %488 = vmatpush1.msra.mxu0 %v335
  %489 = vmatprep.subr.mxu0 0.0
  %490 = vmatpush1.msra.mxu0 %v334
  %491 = vmatprep.subr.mxu0 0.0
  %492 = vmatpush1.msra.mxu0 %v333
  %493 = vmatprep.subr.mxu0 0.0
  %494 = vmatpush2.msra.mxu0 0.0
  %495 = vmatprep.subr.mxu0 0.0
  %496 = vmatpush2.msra.mxu0 0.0
  %497 = vmatprep.subr.mxu0 0.0
  %498 = vmatpush2.msra.mxu0 0.0
  %499 = vmatprep.subr.mxu0 0.0
  %500 = vmatpush2.msra.mxu0 0.0
  %501 = vmatprep.subr.mxu0 0.0
  %502 = vmatpush2.msra.mxu0 0.0
  %503 = vmatprep.subr.mxu0 0.0
  %504 = vmatpush2.msra.mxu0 0.0
  %505 = vmatprep.subr.mxu0 0.0
  %506 = vmatpush2.msra.mxu0 0.0
  %507 = vmatprep.subr.mxu0 0.0
  %508 = vmatpush2.msra.mxu0 0.0
  %509 = vmatprep.subr.mxu0 0.0
  %510 = vmatpush2.msra.mxu0 0.0
  %511 = vmatprep.subr.mxu0 0.0
  %512 = vmatpush2.msra.mxu0 0.0
  %513 = vmatprep.subr.mxu0 0.0
  %514 = vmatpush2.msra.mxu0 0.0
  %515 = vmatprep.subr.mxu0 0.0
  %516 = vmatpush2.msra.mxu0 0.0
  %517 = vmatprep.subr.mxu0 0.0
  %518 = vmatpush2.msra.mxu0 0.0
  %519 = vmatprep.subr.mxu0 0.0
  %520 = vmatpush2.msra.mxu0 0.0
  %521 = vmatprep.subr.mxu0 0.0
  %522 = vmatpush2.msra.mxu0 0.0
  %523 = vmatprep.subr.mxu0 0.0
  %524 = vmatpush2.msra.mxu0 0.0
  %525 = vmatprep.mubr.f32.mxu0 0.0
  %526 = vmatmul.mubr.f32.gmra.mxu0 %v349
  %v527 = vpop.f32.mrf.mxu0
  %v528 = vadd.f32 %v384, %v527
  %v529 = vpop.f32.mrf.mxu0
  %530 = vmatprep.mubr.f32.mxu0 0.0
  %531 = vmatmul.mubr.f32.gmra.mxu0 %v350
  %v532 = vpop.f32.mrf.mxu0
  %v533 = vadd.f32 %v389, %v532
  %v534 = vpop.f32.mrf.mxu0
  %535 = vmatprep.mubr.f32.mxu0 0.0
  %536 = vmatmul.mubr.f32.gmra.mxu0 %v351
  %v537 = vpop.f32.mrf.mxu0
  %v538 = vadd.f32 %v394, %v537
  %v539 = vpop.f32.mrf.mxu0
  %540 = vmatprep.mubr.f32.mxu0 0.0
  %541 = vmatmul.mubr.f32.gmra.mxu0 %v352
  %v542 = vpop.f32.mrf.mxu0
  %v543 = vadd.f32 %v399, %v542
  %v544 = vpop.f32.mrf.mxu0
  %545 = vmatprep.mubr.f32.mxu0 0.0
  %546 = vmatmul.mubr.f32.gmra.mxu0 %v353
  %v547 = vpop.f32.mrf.mxu0
  %v548 = vadd.f32 %v404, %v547
  %v549 = vpop.f32.mrf.mxu0
  %550 = vmatprep.mubr.f32.mxu0 0.0
  %551 = vmatmul.mubr.f32.gmra.mxu0 %v354
  %v552 = vpop.f32.mrf.mxu0
  %v553 = vadd.f32 %v409, %v552
  %v554 = vpop.f32.mrf.mxu0
  %555 = vmatprep.mubr.f32.mxu0 0.0
  %556 = vmatmul.mubr.f32.gmra.mxu0 %v355
  %v557 = vpop.f32.mrf.mxu0
  %v558 = vadd.f32 %v414, %v557
  %v559 = vpop.f32.mrf.mxu0
  %560 = vmatprep.mubr.f32.mxu0 0.0
  %561 = vmatmul.mubr.f32.gmra.mxu0 %v356
  %v562 = vpop.f32.mrf.mxu0
  %v563 = vadd.f32 %v419, %v562
  %v564 = vpop.f32.mrf.mxu0
  %565 = vmatprep.mubr.f32.mxu0 0.0
  %566 = vmatmul.mubr.f32.gmra.mxu0 %v357
  %v567 = vpop.f32.mrf.mxu0
  %v568 = vadd.f32 %v424, %v567
  %v569 = vpop.f32.mrf.mxu0
  %570 = vmatprep.mubr.f32.mxu0 0.0
  %571 = vmatmul.mubr.f32.gmra.mxu0 %v358
  %v572 = vpop.f32.mrf.mxu0
  %v573 = vadd.f32 %v429, %v572
  %v574 = vpop.f32.mrf.mxu0
  %575 = vmatprep.mubr.f32.mxu0 0.0
  %576 = vmatmul.mubr.f32.gmra.mxu0 %v359
  %v577 = vpop.f32.mrf.mxu0
  %v578 = vadd.f32 %v434, %v577
  %v579 = vpop.f32.mrf.mxu0
  %580 = vmatprep.mubr.f32.mxu0 0.0
  %581 = vmatmul.mubr.f32.gmra.mxu0 %v360
  %v582 = vpop.f32.mrf.mxu0
  %v583 = vadd.f32 %v439, %v582
  %v584 = vpop.f32.mrf.mxu0
  %585 = vmatprep.mubr.f32.mxu0 0.0
  %586 = vmatmul.mubr.f32.gmra.mxu0 %v361
  %v587 = vpop.f32.mrf.mxu0
  %v588 = vadd.f32 %v444, %v587
  %v589 = vpop.f32.mrf.mxu0
  %590 = vmatprep.mubr.f32.mxu0 0.0
  %591 = vmatmul.mubr.f32.gmra.mxu0 %v362
  %v592 = vpop.f32.mrf.mxu0
  %v593 = vadd.f32 %v449, %v592
  %v594 = vpop.f32.mrf.mxu0
  %595 = vmatprep.mubr.f32.mxu0 0.0
  %596 = vmatmul.mubr.f32.gmra.mxu0 %v363
  %v597 = vpop.f32.mrf.mxu0
  %v598 = vadd.f32 %v454, %v597
  %v599 = vpop.f32.mrf.mxu0
  %600 = vmatprep.mubr.f32.mxu0 0.0
  %601 = vmatmul.mubr.f32.gmra.mxu0 %v364
  %v602 = vpop.f32.mrf.mxu0
  %v603 = vadd.f32 %v459, %v602
  %v604 = vpop.f32.mrf.mxu0
  %605 = vdwg.mxu0
  %v606 = vtanh.pop %v528
  %v607 = vtanh.pop %v533
  %v608 = vtanh.pop %v538
  %v609 = vtanh.pop %v543
  %v610 = vtanh.pop %v548
  %v611 = vtanh.pop %v553
  %v612 = vtanh.pop %v558
  %v613 = vtanh.pop %v563
  %v614 = vtanh.pop %v568
  %v615 = vtanh.pop %v573
  %v616 = vtanh.pop %v578
  %v617 = vtanh.pop %v583
  %v618 = vtanh.pop %v588
  %v619 = vtanh.pop %v593
  %v620 = vtanh.pop %v598
  %v621 = vtanh.pop %v603
  %v622 = vld [vmem:[%s5] sm:$0xff]
  %v623 = vld [vmem:[%s6] sm:$0xff]
  %625 = vset.pattern.permute.xlu0 0
  %626 = vperm.xlu0 %625, %v623
  %v627 = vpop.permute.xlu0 %626
  %629 = vmatprep.subr.mxu0 0.0
  %630 = vmatpush1.msra.mxu0 %v621
  %631 = vmatprep.subr.mxu0 0.0
  %632 = vmatpush1.msra.mxu0 %v620
  %633 = vmatprep.subr.mxu0 0.0
  %634 = vmatpush1.msra.mxu0 %v619
  %635 = vmatprep.subr.mxu0 0.0
  %636 = vmatpush1.msra.mxu0 %v618
  %637 = vmatprep.subr.mxu0 0.0
  %638 = vmatpush1.msra.mxu0 %v617
  %639 = vmatprep.subr.mxu0 0.0
  %640 = vmatpush1.msra.mxu0 %v616
  %641 = vmatprep.subr.mxu0 0.0
  %642 = vmatpush1.msra.mxu0 %v615
  %643 = vmatprep.subr.mxu0 0.0
  %644 = vmatpush1.msra.mxu0 %v614
  %645 = vmatprep.subr.mxu0 0.0
  %646 = vmatpush1.msra.mxu0 %v613
  %647 = vmatprep.subr.mxu0 0.0
  %648 = vmatpush1.msra.mxu0 %v612
  %649 = vmatprep.subr.mxu0 0.0
  %650 = vmatpush1.msra.mxu0 %v611
  %651 = vmatprep.subr.mxu0 0.0
  %652 = vmatpush1.msra.mxu0 %v610
  %653 = vmatprep.subr.mxu0 0.0
  %654 = vmatpush1.msra.mxu0 %v609
  %655 = vmatprep.subr.mxu0 0.0
  %656 = vmatpush1.msra.mxu0 %v608
  %657 = vmatprep.subr.mxu0 0.0
  %658 = vmatpush1.msra.mxu0 %v607
  %659 = vmatprep.subr.mxu0 0.0
  %660 = vmatpush1.msra.mxu0 %v606
  %661 = vmatprep.subr.mxu0 0.0
  %662 = vmatpush2.msra.mxu0 0.0
  %663 = vmatprep.subr.mxu0 0.0
  %664 = vmatpush2.msra.mxu0 0.0
  %665 = vmatprep.subr.mxu0 0.0
  %666 = vmatpush2.msra.mxu0 0.0
  %667 = vmatprep.subr.mxu0 0.0
  %668 = vmatpush2.msra.mxu0 0.0
  %669 = vmatprep.subr.mxu0 0.0
  %670 = vmatpush2.msra.mxu0 0.0
  %671 = vmatprep.subr.mxu0 0.0
  %672 = vmatpush2.msra.mxu0 0.0
  %673 = vmatprep.subr.mxu0 0.0
  %674 = vmatpush2.msra.mxu0 0.0
  %675 = vmatprep.subr.mxu0 0.0
  %676 = vmatpush2.msra.mxu0 0.0
  %677 = vmatprep.subr.mxu0 0.0
  %678 = vmatpush2.msra.mxu0 0.0
  %679 = vmatprep.subr.mxu0 0.0
  %680 = vmatpush2.msra.mxu0 0.0
  %681 = vmatprep.subr.mxu0 0.0
  %682 = vmatpush2.msra.mxu0 0.0
  %683 = vmatprep.subr.mxu0 0.0
  %684 = vmatpush2.msra.mxu0 0.0
  %685 = vmatprep.subr.mxu0 0.0
  %686 = vmatpush2.msra.mxu0 0.0
  %687 = vmatprep.subr.mxu0 0.0
  %688 = vmatpush2.msra.mxu0 0.0
  %689 = vmatprep.subr.mxu0 0.0
  %690 = vmatpush2.msra.mxu0 0.0
  %691 = vmatprep.subr.mxu0 0.0
  %692 = vmatpush2.msra.mxu0 0.0
  %693 = vmatprep.mubr.f32.mxu0 0.0
  %694 = vmatmul.mubr.f32.gmra.mxu0 %v622
  %v695 = vpop.f32.mrf.mxu0
  %v696 = vadd.f32 %v627, %v695
  %v697 = vpop.f32.mrf.mxu0
  %698 = vdwg.mxu0
  %699 = vst [vmem:[%s7] sm:$0xff] %v696
  // Predicated region
  $region30: #{gaussian_policy_forward.1} parent=0 // pred_check
    _
  $region31: #{gaussian_policy_forward.1} parent=0 // pred_check_branch
    %701 = sbr.rel (0) target = $region33
  $region32: #{gaussian_policy_forward.1} parent=0 // pred_region
    _
  $region33: #{gaussian_policy_forward.1} parent=0 // pred_fallthru
    _
  // Predicated region
  $region34: #{gaussian_policy_forward.1} parent=0 // pred_check
    _
  $region35: #{gaussian_policy_forward.1} parent=0 // pred_check_branch
    %703 = sbr.rel (0) target = $region37
  $region36: #{gaussian_policy_forward.1} parent=0 // pred_region
    _
  $region37: #{gaussian_policy_forward.1} parent=0 // pred_fallthru
    _

</llo_original>
